<compile_context>
chip_gen: v7x
topology: tpu7x:2x2x1
jax: 0.10.0
libtpu: 0.0.40
codegen_flags: <defaults>
</compile_context>

<pallas_src>
import jax
import jax.numpy as jnp
from jax.experimental import pallas as pl
from jax.experimental.pallas import tpu as pltpu


def _round_up(x, m):
    return (x + m - 1) // m * m


# --------------------------------------------------------------------------- #
# Kernels
# --------------------------------------------------------------------------- #

def _make_matmul_kernel(*, has_bias, fuse_bn, emit_stats, multi_k, use_scratch,
                        batch_rows, eps):
    """Tiled x @ W (pre-transposed) with fused bias / BN epilogue / BN stats.

    Ref order: x, w, [bias], [gamma, beta], y, [sum, sumsq], [acc_scratch].
    Grid: (m_tiles, n_tiles[, k_tiles]); k (reduction) is innermost.
    """
    inv_b = 1.0 / float(batch_rows)

    def epilogue(y, b_ref, g_ref, be_ref, o_ref, sum_ref, ssq_ref):
        if has_bias:
            y = y + b_ref[...]
        if fuse_bn:
            # Whole batch lives in this single M tile.  Padded rows are zero
            # (no bias in the BN configuration) so sums are unaffected; divide
            # by the real batch size.  Folded scale/shift epilogue.
            mean = jnp.sum(y, axis=0, keepdims=True) * inv_b
            var = jnp.sum(y * y, axis=0, keepdims=True) * inv_b - mean * mean
            var = jnp.maximum(var, 0.0)
            scale = g_ref[...] * jax.lax.rsqrt(var + eps)
            shift = be_ref[...] - mean * scale
            y = y * scale + shift
        if emit_stats:
            # Streaming BN: per-M-tile partial sum / sum-of-squares (f32).
            # Padded rows are zero, so no masking is needed.
            s = jnp.sum(y, axis=0, keepdims=True)
            q = jnp.sum(y * y, axis=0, keepdims=True)
            sum_ref[...] = jnp.broadcast_to(s, sum_ref.shape)
            ssq_ref[...] = jnp.broadcast_to(q, ssq_ref.shape)
        o_ref[...] = y.astype(o_ref.dtype)

    def kernel(*refs):
        refs = list(refs)
        x_ref = refs.pop(0)
        w_ref = refs.pop(0)
        b_ref = refs.pop(0) if has_bias else None
        g_ref = refs.pop(0) if fuse_bn else None
        be_ref = refs.pop(0) if fuse_bn else None
        o_ref = refs.pop(0)
        sum_ref = refs.pop(0) if emit_stats else None
        ssq_ref = refs.pop(0) if emit_stats else None
        # f32 outputs accumulate directly into the (resident) output block;
        # low-precision outputs use a dedicated f32 scratch accumulator.
        acc_ref = refs.pop(0) if use_scratch else o_ref

        if multi_k:
            k = pl.program_id(2)

            @pl.when(k == 0)
            def _():
                acc_ref[...] = jnp.zeros_like(acc_ref)

            acc_ref[...] += jnp.dot(x_ref[...], w_ref[...],
                                    preferred_element_type=jnp.float32)

            @pl.when(k == pl.num_programs(2) - 1)
            def _():
                epilogue(acc_ref[...], b_ref, g_ref, be_ref, o_ref,
                         sum_ref, ssq_ref)
        else:
            # k_tiles == 1 fast path: no zero-fill, no accumulator round trip.
            y = jnp.dot(x_ref[...], w_ref[...],
                        preferred_element_type=jnp.float32)
            epilogue(y, b_ref, g_ref, be_ref, o_ref, sum_ref, ssq_ref)

    return kernel


def _bn_apply_kernel(y_ref, scale_ref, shift_ref, o_ref):
    """Streaming-BN second pass: pure per-feature scale/shift (tiled M x N)."""
    y = y_ref[...].astype(jnp.float32)
    o_ref[...] = (y * scale_ref[...] + shift_ref[...]).astype(o_ref.dtype)


# --------------------------------------------------------------------------- #
# Wrapper
# --------------------------------------------------------------------------- #

class LinearLayer:
    """Pallas TPU equivalent of the PyTorch LinearLayer module (forward)."""

    # Default tile caps.  N/K sized for the 2x256^2 MXU (v6e/v7x; v5e's 4x128^2
    # decomposes them fine).  Worst-case double-buffered working set ~12 MiB,
    # so it fits every generation once vmem_limit_bytes is raised past v5e's
    # 16 MiB scoped default.
    TM = 512            # M tile cap (general multi-tile path)
    TN = 512            # N tile cap (multiple of 256)
    TK = 1024           # K tile cap
    TM_BN = 1024        # max batch rows kept in ONE tile for the fused-BN path
    VMEM_LIMIT = 32 << 20

    def __init__(self, in_features, out_features, use_bias=True, use_bn=False,
                 key=None, compute_dtype=jnp.bfloat16, eps=1e-5,
                 tm_cap=None, tn_cap=None, tk_cap=None, bn_fuse_cap=None):
        if key is None:
            key = jax.random.PRNGKey(0)
        self.in_features = in_features
        self.out_features = out_features
        self.use_bias = use_bias
        self.use_bn = use_bn
        self.compute_dtype = compute_dtype
        self.eps = float(eps)
        self.tm_cap = int(tm_cap or self.TM)
        self.tn_cap = int(tn_cap or self.TN)
        self.tk_cap = int(tk_cap or self.TK)
        self.bn_fuse_cap = int(bn_fuse_cap or self.TM_BN)
        has_linear_bias = use_bias and (not use_bn)

        kw, kb = jax.random.split(key)
        # nn.Linear default init: U(-1/sqrt(in), 1/sqrt(in)) for weight & bias.
        bound = 1.0 / (in_features ** 0.5)
        self.weight = jax.random.uniform(
            kw, (out_features, in_features), jnp.float32, -bound, bound)

        # ---- Balanced lane-dense tiling for K (batch independent). ----
        k128 = _round_up(in_features, 128) // 128
        k_tiles0 = pl.cdiv(k128 * 128, self.tk_cap)
        self.tk = 128 * pl.cdiv(k128, k_tiles0)
        self.k_tiles = pl.cdiv(k128 * 128, self.tk)
        self.k_pad = self.tk * self.k_tiles

        # ---- Balanced lane-dense tiling for N; prefer >=2 tiles so grids
        # with m_tiles==1 can still shard across v7x's two TensorCores. ----
        n128 = _round_up(out_features, 128) // 128
        n_tiles0 = pl.cdiv(n128 * 128, self.tn_cap)
        if n_tiles0 == 1 and n128 >= 2:
            n_tiles0 = 2
        self.tn = 128 * pl.cdiv(n128, n_tiles0)
        self.n_tiles = pl.cdiv(n128 * 128, self.tn)
        self.n_pad = self.tn * self.n_tiles

        # Pre-transposed, padded, low-precision weight for the MXU: [K_pad, N_pad].
        w_t = jnp.pad(self.weight.T,
                      ((0, self.k_pad - in_features),
                       (0, self.n_pad - out_features)))
        self.w_t = w_t.astype(compute_dtype)

        if has_linear_bias:
            b = jax.random.uniform(
                kb, (out_features,), jnp.float32, -bound, bound)
            self.bias = b
            self.bias_p = jnp.pad(
                b, (0, self.n_pad - out_features)).reshape(1, self.n_pad)
        else:
            self.bias = None
            self.bias_p = None

        if use_bn:
            # BatchNorm1d affine params: gamma=1, beta=0 (kept f32 for stats).
            self.gamma = jnp.ones((out_features,), jnp.float32)
            self.beta = jnp.zeros((out_features,), jnp.float32)
            self.gamma_p = jnp.pad(
                self.gamma, (0, self.n_pad - out_features)).reshape(1, self.n_pad)
            self.beta_p = jnp.pad(
                self.beta, (0, self.n_pad - out_features)).reshape(1, self.n_pad)

    def __call__(self, x):
        B = x.shape[0]
        out_dtype = x.dtype
        sub = 16 if self.compute_dtype == jnp.bfloat16 else 8

        # M tiling: keep the whole batch in one tile when BN can fuse;
        # otherwise balance tiles so B just above a boundary doesn't pad a
        # whole extra tile.
        if self.use_bn and B <= self.bn_fuse_cap:
            tm = _round_up(B, sub)
        else:
            tm = _round_up(pl.cdiv(B, pl.cdiv(B, self.tm_cap)), sub)
        m_pad = _round_up(B, tm)
        m_tiles = m_pad // tm

        fuse_bn = self.use_bn and m_tiles == 1
        emit_stats = self.use_bn and not fuse_bn
        has_bias = self.use_bias and not self.use_bn
        multi_k = self.k_tiles > 1
        use_scratch = multi_k and jnp.dtype(out_dtype) != jnp.dtype(jnp.float32)

        # Cast once for the MXU and pad to the tiled geometry (zero rows/cols
        # are inert in the matmul and contribute nothing to BN statistics).
        xp = x.astype(self.compute_dtype)
        if m_pad != B or self.k_pad != self.in_features:
            xp = jnp.pad(xp, ((0, m_pad - B), (0, self.k_pad - self.in_features)))

        tn, n_tiles, tk, k_tiles = self.tn, self.n_tiles, self.tk, self.k_tiles

        if multi_k:
            grid = (m_tiles, n_tiles, k_tiles)
            dims = ("parallel", "parallel", "arbitrary")
            x_map = lambda i, j, k: (i, k)
            w_map = lambda i, j, k: (k, j)
            v_map = lambda i, j, k: (0, j)
            o_map = lambda i, j, k: (i, j)
        else:
            grid = (m_tiles, n_tiles)
            dims = ("parallel", "parallel")
            x_map = lambda i, j: (i, 0)
            w_map = lambda i, j: (0, j)
            v_map = lambda i, j: (0, j)
            o_map = lambda i, j: (i, j)

        in_specs = [pl.BlockSpec((tm, tk), x_map),
                    pl.BlockSpec((tk, tn), w_map)]
        inputs = [xp, self.w_t]
        if has_bias:
            in_specs.append(pl.BlockSpec((1, tn), v_map))
            inputs.append(self.bias_p)
        if fuse_bn:
            in_specs.append(pl.BlockSpec((1, tn), v_map))
            in_specs.append(pl.BlockSpec((1, tn), v_map))
            inputs += [self.gamma_p, self.beta_p]

        out_shape = [jax.ShapeDtypeStruct((m_pad, self.n_pad), out_dtype)]
        out_specs = [pl.BlockSpec((tm, tn), o_map)]
        if emit_stats:
            # (8, tn) blocks keep the sublane dim tile-aligned; row 0 of each
            # 8-row group carries the per-(M tile, feature) partial sums.
            out_shape += [jax.ShapeDtypeStruct((8 * m_tiles, self.n_pad),
                                               jnp.float32)] * 2
            out_specs += [pl.BlockSpec((8, tn), o_map)] * 2

        scratch = [pltpu.VMEM((tm, tn), jnp.float32)] if use_scratch else []

        kernel = _make_matmul_kernel(
            has_bias=has_bias, fuse_bn=fuse_bn, emit_stats=emit_stats,
            multi_k=multi_k, use_scratch=use_scratch,
            batch_rows=B, eps=self.eps)

        result = pl.pallas_call(
            kernel,
            out_shape=tuple(out_shape),
            grid=grid,
            in_specs=in_specs,
            out_specs=tuple(out_specs),
            scratch_shapes=scratch,
            compiler_params=pltpu.CompilerParams(
                dimension_semantics=dims,
                vmem_limit_bytes=self.VMEM_LIMIT),
        )(*inputs)

        if emit_stats:
            y, sums, ssqs = result
            # Finalize batch statistics outside the kernel (tiny arrays), fold
            # into a single per-feature scale/shift.
            total = sums.reshape(m_tiles, 8, self.n_pad)[:, 0, :].sum(axis=0)
            total_sq = ssqs.reshape(m_tiles, 8, self.n_pad)[:, 0, :].sum(axis=0)
            mean = total / B
            var = jnp.maximum(total_sq / B - mean * mean, 0.0)
            scale = self.gamma_p[0] * jax.lax.rsqrt(var + self.eps)
            shift = self.beta_p[0] - mean * scale
            scale = scale.reshape(1, self.n_pad)
            shift = shift.reshape(1, self.n_pad)
            # Second pass: pure scale/shift, tiled in both M and N so no
            # full-batch column block is ever resident in VMEM (v7x-safe).
            y = pl.pallas_call(
                _bn_apply_kernel,
                out_shape=jax.ShapeDtypeStruct((m_pad, self.n_pad), out_dtype),
                grid=(m_tiles, n_tiles),
                in_specs=[pl.BlockSpec((tm, tn), lambda i, j: (i, j)),
                          pl.BlockSpec((1, tn), lambda i, j: (0, j)),
                          pl.BlockSpec((1, tn), lambda i, j: (0, j))],
                out_specs=pl.BlockSpec((tm, tn), lambda i, j: (i, j)),
                compiler_params=pltpu.CompilerParams(
                    dimension_semantics=("parallel", "parallel"),
                    vmem_limit_bytes=self.VMEM_LIMIT),
            )(y, scale, shift)
        else:
            y = result[0] if isinstance(result, (tuple, list)) else result

        # Slice off batch/feature padding.
        return y[:B, :self.out_features]


# TODO(synk): BatchNorm1d running_mean/running_var buffer updates (training
# bookkeeping) are not modeled; they do not affect the forward output.


# --------------------------------------------------------------------------- #
# Self-test
# --------------------------------------------------------------------------- #

if __name__ == "__main__":
    key = jax.random.PRNGKey(0)
    kx, kx2, kx3, k1, k2, k3, k4 = jax.random.split(key, 7)
    cd = jnp.bfloat16

    # 1) Plain linear + bias (k_tiles == 1 fast path, no scratch, f32 out).
    B, IN, OUT = 8, 32, 16
    x = jax.random.normal(kx, (B, IN), jnp.float32)
    layer = LinearLayer(IN, OUT, use_bias=True, use_bn=False, key=k1)
    y = layer(x)
    jax.block_until_ready(y)
    ref = jnp.dot(x.astype(cd), layer.weight.T.astype(cd),
                  preferred_element_type=jnp.float32) + layer.bias[None, :]
    assert y.shape == (B, OUT)
    assert jnp.allclose(y, ref, atol=1e-3, rtol=1e-3), "linear mismatch"

    # 2) Fused BatchNorm epilogue (whole batch in one M tile).
    layer_bn = LinearLayer(IN, OUT, use_bias=True, use_bn=True, key=k2)
    y_bn = layer_bn(x)
    jax.block_until_ready(y_bn)
    z = jnp.dot(x.astype(cd), layer_bn.weight.T.astype(cd),
                preferred_element_type=jnp.float32)
    m = z.mean(0, keepdims=True)
    v = ((z - m) ** 2).mean(0, keepdims=True)
    ref_bn = (z - m) / jnp.sqrt(v + 1e-5)
    assert y_bn.shape == (B, OUT)
    assert jnp.allclose(y_bn, ref_bn, atol=2e-3, rtol=2e-3), "fused BN mismatch"

    # 3) Streaming BatchNorm (multiple M tiles + K reduction); tiny tile caps
    #    exercise the multi-tile path at small shapes.
    B3, IN3, OUT3 = 48, 160, 300
    x3 = jax.random.normal(kx2, (B3, IN3), jnp.float32)
    layer_s = LinearLayer(IN3, OUT3, use_bias=True, use_bn=True, key=k3,
                          tm_cap=32, tn_cap=128, tk_cap=128, bn_fuse_cap=16)
    y_s = layer_s(x3)
    jax.block_until_ready(y_s)
    z3 = jnp.dot(x3.astype(cd), layer_s.weight.T.astype(cd),
                 preferred_element_type=jnp.float32)
    m3 = z3.mean(0, keepdims=True)
    v3 = ((z3 - m3) ** 2).mean(0, keepdims=True)
    ref_s = (z3 - m3) / jnp.sqrt(v3 + 1e-5)
    assert y_s.shape == (B3, OUT3)
    assert jnp.allclose(y_s, ref_s, atol=5e-3, rtol=5e-3), "streaming BN mismatch"

    # 4) bf16 activations + K reduction with f32 scratch accumulator.
    x4 = jax.random.normal(kx3, (B3, IN3), jnp.bfloat16)
    layer4 = LinearLayer(IN3, OUT3, use_bias=True, use_bn=False, key=k4,
                         tk_cap=128)
    y4 = layer4(x4)
    jax.block_until_ready(y4)
    ref4 = (jnp.dot(x4, layer4.weight.T.astype(cd),
                    preferred_element_type=jnp.float32)
            + layer4.bias[None, :]).astype(jnp.bfloat16)
    assert y4.shape == (B3, OUT3)
    assert jnp.allclose(y4.astype(jnp.float32), ref4.astype(jnp.float32),
                        atol=3e-2, rtol=3e-2), "bf16 linear mismatch"

    print("KERNEL_OK")
</pallas_src>

<mosaic_0001>
module attributes {stable_mosaic.version = 11 : i64} {
  func.func @kernel(%arg0: i32, %arg1: i32, %arg2: memref<16x128xbf16, #tpu.memory_space<vmem>>, %arg3: memref<128x128xbf16, #tpu.memory_space<vmem>>, %arg4: memref<1x128xf32, #tpu.memory_space<vmem>>, %arg5: memref<16x128xf32, #tpu.memory_space<vmem>>) attributes {dimension_semantics = [#tpu.dimension_semantics<parallel>, #tpu.dimension_semantics<parallel>], iteration_bounds = array<i64: 1, 1>, scalar_prefetch = 0 : i64, scratch_operands = 0 : i64, tpu.core_type = #tpu.core_type<tc>, window_params = [{transform_indices = @transform_0, window_bounds = array<i64: 16, 128>}, {transform_indices = @transform_1, window_bounds = array<i64: 128, 128>}, {transform_indices = @transform_2, window_bounds = array<i64: 1, 128>}, {transform_indices = @transform_3, window_bounds = array<i64: 16, 128>}]} {
    %c0 = arith.constant 0 : index
    %c0_0 = arith.constant 0 : index
    %0 = vector.load %arg2[%c0, %c0_0] : memref<16x128xbf16, #tpu.memory_space<vmem>>, vector<16x128xbf16>
    %c0_1 = arith.constant 0 : index
    %c0_2 = arith.constant 0 : index
    %1 = vector.load %arg3[%c0_1, %c0_2] : memref<128x128xbf16, #tpu.memory_space<vmem>>, vector<128x128xbf16>
    %cst = arith.constant dense<0.000000e+00> : vector<16x128xf32>
    %2 = tpu.matmul %0, %1, %cst {dimension_numbers = #tpu.dot_dimension_numbers<[1], [0], [0], [1], [0, 0, 1, 1], [], []>} : vector<16x128xbf16>, vector<128x128xbf16>, vector<16x128xf32> -> vector<16x128xf32>
    %c0_3 = arith.constant 0 : index
    %c0_4 = arith.constant 0 : index
    %3 = vector.load %arg4[%c0_3, %c0_4] : memref<1x128xf32, #tpu.memory_space<vmem>>, vector<1x128xf32>
    %4 = vector.broadcast %3 : vector<1x128xf32> to vector<16x128xf32>
    %5 = arith.addf %2, %4 : vector<16x128xf32>
    %c0_5 = arith.constant 0 : index
    %c0_6 = arith.constant 0 : index
    %6 = vector.load %arg5[%c0_5, %c0_6] : memref<16x128xf32, #tpu.memory_space<vmem>>, vector<16x128xf32>
    tpu.vector_store %arg5[%c0_5, %c0_6], %5 {strides = array<i32>} : memref<16x128xf32, #tpu.memory_space<vmem>>, vector<16x128xf32>,
    return
  }
  func.func @transform_0(%arg0: i32, %arg1: i32) -> (i32, i32) {
    %c0_i32 = arith.constant 0 : i32
    %c0_i32_0 = arith.constant 0 : i32
    return %arg0, %c0_i32 : i32, i32
  }
  func.func @transform_1(%arg0: i32, %arg1: i32) -> (i32, i32) {
    %c0_i32 = arith.constant 0 : i32
    %c0_i32_0 = arith.constant 0 : i32
    return %c0_i32, %arg1 : i32, i32
  }
  func.func @transform_2(%arg0: i32, %arg1: i32) -> (i32, i32) {
    %c0_i32 = arith.constant 0 : i32
    %c0_i32_0 = arith.constant 0 : i32
    return %c0_i32, %arg1 : i32, i32
  }
  func.func @transform_3(%arg0: i32, %arg1: i32) -> (i32, i32) {
    %c0_i32 = arith.constant 0 : i32
    return %arg0, %arg1 : i32, i32
  }
}

</mosaic_0001>

<llo_original>
// kernel: tpu_custom_call.1
$region0: #{tpu_custom_call.1}
  #allocation0 [shape = 'u32[]', space=smem, size = 0x4, offset = 0x4, fixed_abs, tag = 'smem constant byte address 0x4 - core index']
  #allocation1 [shape = 'u32[144,128]{1,0:T(1,128)}', space=vmem, size = 0x12000, scoped, tag = 'internal scratch']
  %s0 = inlined_call_operand.hbm [shape: bf16[16,128], index: 0, kind: input, shape index: {}]
  %s1 = inlined_call_operand.hbm [shape: bf16[128,128], index: 1, kind: input, shape index: {}]
  %s2 = inlined_call_operand.vmem [shape: f32[1,128], index: 2, kind: input, shape index: {}]
  %s3 = inlined_call_operand.hbm [shape: f32[16,128], index: 3, kind: output, shape index: {}]
  %s4 = sld [smem:[#allocation0]]
  $region30: #{tpu_custom_call.1} parent=0
    _
  %s6 = ssub.s32 1, %s4
  %s7 = scalar_select 0, %s6, %s4
  $region1: #{tpu_custom_call.1} parent=0
    #allocation2 [shape = 'u8[4096]{0}', space=vmem, size = 0x1000, scoped, tag = 'input window, operand 0, single buffered']
    #allocation3 [shape = 's32[1]{0}', space=sflag, size = 0x4, scoped, tag = 'scoped memory for tpu_custom_call.1']
    #allocation4 [shape = 's32[1]{0}', space=sflag, size = 0x4, scoped, tag = 'scoped memory for tpu_custom_call.1']
    #allocation5 [shape = 'u8[32768]{0}', space=vmem, size = 0x8000, scoped, tag = 'input window, operand 1, single buffered']
    #allocation6 [shape = 's32[1]{0}', space=sflag, size = 0x4, scoped, tag = 'scoped memory for tpu_custom_call.1']
    #allocation7 [shape = 'u8[8192]{0}', space=vmem, size = 0x2000, scoped, tag = 'output window, operand 0, single buffered']
    %8 = vsyncpa [#allocation3], 0
    %9 = vsyncpa [#allocation6], 0
    %10 = vsyncpa [#allocation4], 0
    // Predicated region
    $region2: #{tpu_custom_call.1} parent=1 // pred_check
      _
    $region3: #{tpu_custom_call.1} parent=1 // pred_check_branch
      %12 = sbr.rel (0) target = $region5
    $region4: #{tpu_custom_call.1} parent=1 // pred_region
      %s14 = ssub.s32 128, 128
      %15 = vsyncadd [#allocation3], %s14
      %s16 = sshll.u32 [#allocation2], 4
      %s17 = int_to_ptr.vmem [resolvable:$true] %s16
      %22 = dma.hbm_to_vmem [thread:$0]  %s0, 128, %s17, [#allocation3], 64, 64, 4
    $region5: #{tpu_custom_call.1} parent=1 // pred_fallthru
      _
    // Predicated region
    $region6: #{tpu_custom_call.1} parent=1 // pred_check
      _
    $region7: #{tpu_custom_call.1} parent=1 // pred_check_branch
      %24 = sbr.rel (0) target = $region9
    $region8: #{tpu_custom_call.1} parent=1 // pred_region
      %s26 = ssub.s32 1024, 1024
      %27 = vsyncadd [#allocation6], %s26
      %s28 = sshll.u32 [#allocation5], 4
      %s29 = int_to_ptr.vmem [resolvable:$true] %s28
      %34 = dma.hbm_to_vmem [thread:$0]  %s1, 1024, %s29, [#allocation6], 64, 64, 4
    $region9: #{tpu_custom_call.1} parent=1 // pred_fallthru
      _
    // Predicated region
    $region10: #{tpu_custom_call.1} parent=1 // pred_check
      _
    $region11: #{tpu_custom_call.1} parent=1 // pred_check_branch
      %36 = sbr.rel (0) target = $region13
    $region12: #{tpu_custom_call.1} parent=1 // pred_region
      _
    $region13: #{tpu_custom_call.1} parent=1 // pred_fallthru
      _
    // Predicated region
    $region14: #{tpu_custom_call.1} parent=1 // pred_check
      _
    $region15: #{tpu_custom_call.1} parent=1 // pred_check_branch
      %38 = sbr.rel (0) target = $region17
    $region16: #{tpu_custom_call.1} parent=1 // pred_region
      %39 = dma.done [#allocation3], 128
    $region17: #{tpu_custom_call.1} parent=1 // pred_fallthru
      _
    // Predicated region
    $region18: #{tpu_custom_call.1} parent=1 // pred_check
      _
    $region19: #{tpu_custom_call.1} parent=1 // pred_check_branch
      %41 = sbr.rel (0) target = $region21
    $region20: #{tpu_custom_call.1} parent=1 // pred_region
      %42 = dma.done [#allocation6], 1024
    $region21: #{tpu_custom_call.1} parent=1 // pred_fallthru
      _
    %v44 = vld [vmem:[#allocation2] sm:$0xf]
    %v45 = vld [vmem:[#allocation2 + $0x4] sm:$0xf]
    %v46 = vld [vmem:[#allocation5] sm:$0xf]
    %v47 = vld [vmem:[#allocation5 + $0x4] sm:$0xf]
    %v48 = vld [vmem:[#allocation5 + $0x8] sm:$0xf]
    %v49 = vld [vmem:[#allocation5 + $0xc] sm:$0xf]
    %v50 = vld [vmem:[#allocation5 + $0x10] sm:$0xf]
    %v51 = vld [vmem:[#allocation5 + $0x14] sm:$0xf]
    %v52 = vld [vmem:[#allocation5 + $0x18] sm:$0xf]
    %v53 = vld [vmem:[#allocation5 + $0x1c] sm:$0xf]
    %v54 = vld [vmem:[#allocation5 + $0x20] sm:$0xf]
    %v55 = vld [vmem:[#allocation5 + $0x24] sm:$0xf]
    %v56 = vld [vmem:[#allocation5 + $0x28] sm:$0xf]
    %v57 = vld [vmem:[#allocation5 + $0x2c] sm:$0xf]
    %v58 = vld [vmem:[#allocation5 + $0x30] sm:$0xf]
    %v59 = vld [vmem:[#allocation5 + $0x34] sm:$0xf]
    %v60 = vld [vmem:[#allocation5 + $0x38] sm:$0xf]
    %v61 = vld [vmem:[#allocation5 + $0x3c] sm:$0xf]
    %v62 = vld [vmem:[%s2] sm:$0x1]
    %v64 = vlaneseq
    %v65 = vshrl.u32 %v64, 7
    %v66 = vsub.s32 0, %v65
    %v67 = vrot.slane %v62, %v66
    %v71 = vunpack.c.l.b16 %v44
    %v72 = vunpack.c.l.b16 %v45
    %v73 = vpack.c.b16 %v72, %v71
    %v91 = vunpack.c.l.b16 %v46
    %v92 = vunpack.c.l.b16 %v47
    %v93 = vunpack.c.l.b16 %v48
    %v94 = vunpack.c.l.b16 %v49
    %v95 = vunpack.c.l.b16 %v50
    %v96 = vunpack.c.l.b16 %v51
    %v97 = vunpack.c.l.b16 %v52
    %v98 = vunpack.c.l.b16 %v53
    %v99 = vunpack.c.l.b16 %v54
    %v100 = vunpack.c.l.b16 %v55
    %v101 = vunpack.c.l.b16 %v56
    %v102 = vunpack.c.l.b16 %v57
    %v103 = vunpack.c.l.b16 %v58
    %v104 = vunpack.c.l.b16 %v59
    %v105 = vunpack.c.l.b16 %v60
    %v106 = vunpack.c.l.b16 %v61
    %v107 = vpack.c.b16 %v92, %v91
    %v108 = vpack.c.b16 %v94, %v93
    %v109 = vpack.c.b16 %v96, %v95
    %v110 = vpack.c.b16 %v98, %v97
    %v111 = vpack.c.b16 %v100, %v99
    %v112 = vpack.c.b16 %v102, %v101
    %v113 = vpack.c.b16 %v104, %v103
    %v114 = vpack.c.b16 %v106, %v105
    %123 = vmatprep.subr.bf16.mxu0 0
    %124 = vmatpush1.bf16.msra.mxu0 %v107
    %125 = vmatprep.subr.bf16.mxu0 0
    %126 = vmatpush1.bf16.msra.mxu0 %v108
    %127 = vmatprep.subr.bf16.mxu0 0
    %128 = vmatpush1.bf16.msra.mxu0 %v109
    %129 = vmatprep.subr.bf16.mxu0 0
    %130 = vmatpush1.bf16.msra.mxu0 %v110
    %131 = vmatprep.subr.bf16.mxu0 0
    %132 = vmatpush1.bf16.msra.mxu0 %v111
    %133 = vmatprep.subr.bf16.mxu0 0
    %134 = vmatpush1.bf16.msra.mxu0 %v112
    %135 = vmatprep.subr.bf16.mxu0 0
    %136 = vmatpush1.bf16.msra.mxu0 %v113
    %137 = vmatprep.subr.bf16.mxu0 0
    %138 = vmatpush1.bf16.msra.mxu0 %v114
    %139 = vmatprep.subr.bf16.mxu0 0
    %140 = vmatpush1.bf16.msra.mxu0 0
    %141 = vmatprep.subr.bf16.mxu0 0
    %142 = vmatpush1.bf16.msra.mxu0 0
    %143 = vmatprep.subr.bf16.mxu0 0
    %144 = vmatpush1.bf16.msra.mxu0 0
    %145 = vmatprep.subr.bf16.mxu0 0
    %146 = vmatpush1.bf16.msra.mxu0 0
    %147 = vmatprep.subr.bf16.mxu0 0
    %148 = vmatpush1.bf16.msra.mxu0 0
    %149 = vmatprep.subr.bf16.mxu0 0
    %150 = vmatpush1.bf16.msra.mxu0 0
    %151 = vmatprep.subr.bf16.mxu0 0
    %152 = vmatpush1.bf16.msra.mxu0 0
    %153 = vmatprep.subr.bf16.mxu0 0
    %154 = vmatpush1.bf16.msra.mxu0 0
    %155 = vmatprep.mubr.bf16.mxu0 0
    %156 = vmatmul.mubr.bf16.gmra.mrb[0].mxu0 %v73
    %v157 = vpop.f32.mrb[0].mxu0
    %v158 = vadd.f32 %v67, %v157
    %v159 = vpop.f32.mrb[0].mxu0
    %v160 = vpop.f32.mrb[0].mxu0
    %v161 = vadd.f32 %v67, %v160
    %v162 = vpop.f32.mrb[0].mxu0
    %163 = vdwg.mxu0
    %164 = vst [vmem:[#allocation7] sm:$0xff] %v158
    %165 = vst [vmem:[#allocation7 + $0x8] sm:$0xff] %v161
    // Predicated region
    $region22: #{tpu_custom_call.1} parent=1 // pred_check
      _
    $region23: #{tpu_custom_call.1} parent=1 // pred_check_branch
      %167 = sbr.rel (0) target = $region25
    $region24: #{tpu_custom_call.1} parent=1 // pred_region
      %s169 = ssub.s32 256, 256
      %170 = vsyncadd [#allocation4], %s169
      %s171 = sshll.u32 [#allocation7], 4
      %s172 = int_to_ptr.vmem [resolvable:$true] %s171
      %177 = dma.vmem_to_hbm [thread:$0]  %s172, 256, %s3, [#allocation4], 128, 128, 8
    $region25: #{tpu_custom_call.1} parent=1 // pred_fallthru
      _
    // Predicated region
    $region26: #{tpu_custom_call.1} parent=1 // pred_check
      _
    $region27: #{tpu_custom_call.1} parent=1 // pred_check_branch
      %179 = sbr.rel (0) target = $region29
    $region28: #{tpu_custom_call.1} parent=1 // pred_region
      %180 = dma.done [#allocation4], 256
    $region29: #{tpu_custom_call.1} parent=1 // pred_fallthru
      _
    %181 = vsyncpa [#allocation3], 1
    %182 = vsyncpa [#allocation6], 1
    %183 = vsyncpa [#allocation4], 1

</llo_original>
